<compile_context>
chip_gen: v7x
topology: tpu7x:2x2x1
jax: 0.10.0
libtpu: 0.0.40
codegen_flags: <defaults>
</compile_context>

<pallas_src>
import functools

import jax
import jax.numpy as jnp
from jax.experimental import pallas as pl
from jax.experimental.pallas import tpu as pltpu

EPS = 1e-5
LANE = 128
_DEFAULT_TM = 512                      # rows (N*Ho*Wo) per grid step
_VMEM_LIMIT_BYTES = 48 * 1024 * 1024   # safe on v5e (128M), v6e (128M), v7x (64M)


def _round_up(x, m):
    return (x + m - 1) // m * m


def _compiler_params():
    cls = getattr(pltpu, "CompilerParams", None) or getattr(pltpu, "TPUCompilerParams", None)
    if cls is None:
        return None
    return cls(dimension_semantics=("parallel",),
               vmem_limit_bytes=_VMEM_LIMIT_BYTES)


# ---------------------------------------------------------------------------
# Pallas kernels (bf16 matmul on MXU, f32 accumulate, fused BN shift / ReLU /
# shortcut projection / residual add)
# ---------------------------------------------------------------------------
def _conv_bn_kernel(p_ref, w_ref, shift_ref, o_ref, *, apply_relu):
    """y = relu?( (patches @ w_scaled) + shift )   (BN scale pre-folded into w)"""
    y = jnp.dot(p_ref[...], w_ref[...], preferred_element_type=jnp.float32)
    y = y + shift_ref[...]
    if apply_relu:
        y = jnp.maximum(y, 0.0)
    o_ref[...] = y.astype(o_ref.dtype)


def _conv_bn_proj_add_relu_kernel(p_ref, w_ref, shift_ref,
                                  xs_ref, ws_ref, sshift_ref, o_ref):
    """y = relu( (patches @ w2) + shift2 + (x_strided @ ws) + shift_s )

    The 1x1-conv shortcut projection is computed as a second small dot on the
    strided-input tile, so the residual never round-trips HBM.
    """
    y = jnp.dot(p_ref[...], w_ref[...], preferred_element_type=jnp.float32)
    y = y + shift_ref[...]
    r = jnp.dot(xs_ref[...], ws_ref[...], preferred_element_type=jnp.float32)
    r = r + sshift_ref[...]
    o_ref[...] = jnp.maximum(y + r, 0.0).astype(o_ref.dtype)


def _conv_bn_ident_add_relu_kernel(p_ref, w_ref, shift_ref, res_ref, o_ref):
    """y = relu( (patches @ w2) + shift2 + residual )   (identity shortcut)"""
    y = jnp.dot(p_ref[...], w_ref[...], preferred_element_type=jnp.float32)
    y = y + shift_ref[...]
    o_ref[...] = jnp.maximum(y + res_ref[...], 0.0).astype(o_ref.dtype)


def _call_tiled(kernel, args, m_padded, cp, tm, out_dtype):
    """Tiled pallas_call over the M (row) axis.

    args: list of (array, row_tiled) in kernel-argument order.
      row_tiled=True  -> (tm, K_i) block streamed per grid step (double-buffered)
      row_tiled=False -> whole array resident in VMEM (constant block index,
                         fetched once: weights / BN shifts)
    """
    arrays, in_specs = [], []
    for a, tiled in args:
        arrays.append(a)
        if tiled:
            in_specs.append(pl.BlockSpec((tm, a.shape[1]), lambda i: (i, 0)))
        else:
            in_specs.append(pl.BlockSpec(a.shape, lambda i, nd=a.ndim: (0,) * nd))
    return pl.pallas_call(
        kernel,
        out_shape=jax.ShapeDtypeStruct((m_padded, cp), out_dtype),
        grid=(m_padded // tm,),
        in_specs=in_specs,
        out_specs=pl.BlockSpec((tm, cp), lambda i: (i, 0)),
        compiler_params=_compiler_params(),
    )(*arrays)


# ---------------------------------------------------------------------------
# Glue: im2col, weight/BN folding (plain JAX)
# ---------------------------------------------------------------------------
def _im2col(x_nhwc, ksize, stride, pad):
    n, h, w, c = x_nhwc.shape
    xp = jnp.pad(x_nhwc, ((0, 0), (pad, pad), (pad, pad), (0, 0)))
    ho = (h + 2 * pad - ksize) // stride + 1
    wo = (w + 2 * pad - ksize) // stride + 1
    cols = []
    for di in range(ksize):
        for dj in range(ksize):
            cols.append(xp[:, di:di + stride * ho:stride,
                           dj:dj + stride * wo:stride, :])
    patches = jnp.concatenate(cols, axis=-1)          # (n, ho, wo, k*k*c)
    return patches.reshape(n * ho * wo, ksize * ksize * c), (n, ho, wo)


def _fold_conv_bn(w_oihw, gamma, beta, mean, var, cp):
    """Fold eval-mode BN into the conv weight; pad Cout to a lane-dense cp."""
    cout, cin, kh, kw = w_oihw.shape
    scale = gamma / jnp.sqrt(var + EPS)
    shift = beta - mean * scale
    # column order matches _im2col: (di, dj, cin) -> (kh, kw, cin, cout)
    w_mat = jnp.transpose(w_oihw, (2, 3, 1, 0)).reshape(kh * kw * cin, cout)
    w_mat = w_mat * scale[None, :]
    w_mat = jnp.pad(w_mat, ((0, 0), (0, cp - cout))).astype(jnp.bfloat16)
    shift = jnp.pad(shift, (0, cp - cout)).reshape(1, cp).astype(jnp.float32)
    return w_mat, shift


# ---------------------------------------------------------------------------
# BasicBlock forward
# ---------------------------------------------------------------------------
def basic_block_forward(x_nchw, params, stride):
    x = jnp.transpose(x_nchw, (0, 2, 3, 1)).astype(jnp.float32)   # -> NHWC
    n, h, w, cin = x.shape
    cout = params["w1"].shape[0]
    cp = _round_up(cout, LANE)                 # lane-dense output columns
    has_projection = (stride != 1) or (cin != cout)

    # ---- residual branch conv1: 3x3/stride + BN + ReLU --------------------
    p1, (n_, ho, wo) = _im2col(x, 3, stride, 1)
    m = n_ * ho * wo
    tm = _DEFAULT_TM if m >= _DEFAULT_TM else _round_up(m, 8)
    mp = _round_up(m, tm)

    p1 = jnp.pad(p1, ((0, mp - m), (0, 0))).astype(jnp.bfloat16)
    w1, sh1 = _fold_conv_bn(params["w1"], params["g1"], params["b1"],
                            params["m1"], params["v1"], cp)
    y1p = _call_tiled(
        functools.partial(_conv_bn_kernel, apply_relu=True),
        [(p1, True), (w1, False), (sh1, False)],
        mp, cp, tm, jnp.bfloat16)
    y1 = y1p[:m, :cout].reshape(n_, ho, wo, cout)

    # ---- residual branch conv2: 3x3 + BN, fused shortcut, +, ReLU ---------
    p2, _ = _im2col(y1, 3, 1, 1)
    p2 = jnp.pad(p2, ((0, mp - m), (0, 0))).astype(jnp.bfloat16)
    w2, sh2 = _fold_conv_bn(params["w2"], params["g2"], params["b2"],
                            params["m2"], params["v2"], cp)

    if has_projection:
        # 1x1/stride shortcut conv fused into the final kernel.
        xs, _ = _im2col(x, 1, stride, 0)                    # (m, cin)
        xs = jnp.pad(xs, ((0, mp - m), (0, 0))).astype(jnp.bfloat16)
        ws, shs = _fold_conv_bn(params["ws"], params["gs"], params["bs"],
                                params["ms"], params["vs"], cp)
        outp = _call_tiled(
            _conv_bn_proj_add_relu_kernel,
            [(p2, True), (w2, False), (sh2, False),
             (xs, True), (ws, False), (shs, False)],
            mp, cp, tm, jnp.float32)
    else:
        res = x.reshape(m, cout)
        res = jnp.pad(res, ((0, mp - m), (0, cp - cout))).astype(jnp.float32)
        outp = _call_tiled(
            _conv_bn_ident_add_relu_kernel,
            [(p2, True), (w2, False), (sh2, False), (res, True)],
            mp, cp, tm, jnp.float32)

    out = outp[:m, :cout].reshape(n_, ho, wo, cout)
    return jnp.transpose(out, (0, 3, 1, 2))                 # back to NCHW


# ---------------------------------------------------------------------------
# Pure-JAX reference (lax.conv) for correctness check
# ---------------------------------------------------------------------------
def _ref_forward(x, p, stride, has_projection):
    def conv(x_, w_, s_, pad):
        return jax.lax.conv_general_dilated(
            x_, w_, (s_, s_), [(pad, pad), (pad, pad)],
            dimension_numbers=("NCHW", "OIHW", "NCHW"))

    def bn(x_, g, b, m, v):
        rs = lambda t: t[None, :, None, None]
        return (x_ - rs(m)) / jnp.sqrt(rs(v) + EPS) * rs(g) + rs(b)

    y = jax.nn.relu(bn(conv(x, p["w1"], stride, 1),
                       p["g1"], p["b1"], p["m1"], p["v1"]))
    y = bn(conv(y, p["w2"], 1, 1), p["g2"], p["b2"], p["m2"], p["v2"])
    if has_projection:
        sc = bn(conv(x, p["ws"], stride, 0),
                p["gs"], p["bs"], p["ms"], p["vs"])
    else:
        sc = x
    return jax.nn.relu(y + sc)


# ---------------------------------------------------------------------------
if __name__ == "__main__":
    in_ch, out_ch, stride = 4, 8, 2
    N, H, W = 2, 16, 16

    key = jax.random.PRNGKey(0)
    ks = jax.random.split(key, 17)
    f32 = jnp.float32

    x = jax.random.normal(ks[0], (N, in_ch, H, W), f32)
    params = {
        # conv1 (3x3, stride) + BN1
        "w1": 0.1 * jax.random.normal(ks[1], (out_ch, in_ch, 3, 3), f32),
        "g1": jax.random.uniform(ks[2], (out_ch,), f32, 0.5, 1.5),
        "b1": 0.1 * jax.random.normal(ks[3], (out_ch,), f32),
        "m1": 0.1 * jax.random.normal(ks[4], (out_ch,), f32),
        "v1": jax.random.uniform(ks[5], (out_ch,), f32, 0.5, 1.5),
        # conv2 (3x3) + BN2
        "w2": 0.1 * jax.random.normal(ks[6], (out_ch, out_ch, 3, 3), f32),
        "g2": jax.random.uniform(ks[7], (out_ch,), f32, 0.5, 1.5),
        "b2": 0.1 * jax.random.normal(ks[8], (out_ch,), f32),
        "m2": 0.1 * jax.random.normal(ks[9], (out_ch,), f32),
        "v2": jax.random.uniform(ks[10], (out_ch,), f32, 0.5, 1.5),
        # shortcut conv (1x1, stride) + BN
        "ws": 0.1 * jax.random.normal(ks[11], (out_ch, in_ch, 1, 1), f32),
        "gs": jax.random.uniform(ks[12], (out_ch,), f32, 0.5, 1.5),
        "bs": 0.1 * jax.random.normal(ks[13], (out_ch,), f32),
        "ms": 0.1 * jax.random.normal(ks[14], (out_ch,), f32),
        "vs": jax.random.uniform(ks[15], (out_ch,), f32, 0.5, 1.5),
    }

    fwd = jax.jit(basic_block_forward, static_argnums=2)
    out = jax.block_until_ready(fwd(x, params, stride))

    has_projection = (stride != 1) or (in_ch != out_ch)
    ref = _ref_forward(x, params, stride, has_projection)

    assert out.shape == (N, out_ch, H // stride, W // stride), out.shape
    # bf16 MXU inputs (f32 accumulation) -> compare against f32 reference with
    # a tolerance consistent with bf16 rounding of activations and weights.
    assert jnp.allclose(out, ref, atol=2e-2, rtol=2e-2), "mismatch vs reference"
    print("KERNEL_OK")
</pallas_src>

<mosaic_0001>
module attributes {stable_mosaic.version = 11 : i64} {
  func.func @_conv_bn_kernel(%arg0: i32, %arg1: memref<128x36xbf16, #tpu.memory_space<vmem>>, %arg2: memref<36x128xbf16, #tpu.memory_space<vmem>>, %arg3: memref<1x128xf32, #tpu.memory_space<vmem>>, %arg4: memref<128x128xbf16, #tpu.memory_space<vmem>>) attributes {dimension_semantics = [#tpu.dimension_semantics<parallel>], iteration_bounds = array<i64: 1>, scalar_prefetch = 0 : i64, scratch_operands = 0 : i64, tpu.core_type = #tpu.core_type<tc>, window_params = [{transform_indices = @transform_0, window_bounds = array<i64: 128, 36>}, {pipeline_mode = #tpu.pipeline_mode<synchronous>, transform_indices = @transform_1, window_bounds = array<i64: 36, 128>}, {pipeline_mode = #tpu.pipeline_mode<synchronous>, transform_indices = @transform_2, window_bounds = array<i64: 1, 128>}, {transform_indices = @transform_3, window_bounds = array<i64: 128, 128>}]} {
    %c0 = arith.constant 0 : index
    %c0_0 = arith.constant 0 : index
    %0 = vector.load %arg1[%c0, %c0_0] : memref<128x36xbf16, #tpu.memory_space<vmem>>, vector<128x36xbf16>
    %c0_1 = arith.constant 0 : index
    %c0_2 = arith.constant 0 : index
    %1 = vector.load %arg2[%c0_1, %c0_2] : memref<36x128xbf16, #tpu.memory_space<vmem>>, vector<36x128xbf16>
    %cst = arith.constant dense<0.000000e+00> : vector<128x128xf32>
    %2 = tpu.matmul %0, %1, %cst {dimension_numbers = #tpu.dot_dimension_numbers<[1], [0], [0], [1], [0, 0, 1, 1], [], []>} : vector<128x36xbf16>, vector<36x128xbf16>, vector<128x128xf32> -> vector<128x128xf32>
    %c0_3 = arith.constant 0 : index
    %c0_4 = arith.constant 0 : index
    %3 = vector.load %arg3[%c0_3, %c0_4] : memref<1x128xf32, #tpu.memory_space<vmem>>, vector<1x128xf32>
    %4 = vector.broadcast %3 : vector<1x128xf32> to vector<128x128xf32>
    %5 = arith.addf %2, %4 : vector<128x128xf32>
    %cst_5 = arith.constant 0.000000e+00 : f32
    %6 = vector.broadcast %cst_5 : f32 to vector<128x128xf32>
    %7 = arith.maximumf %5, %6 : vector<128x128xf32>
    %8 = arith.truncf %7 : vector<128x128xf32> to vector<128x128xbf16>
    %c0_6 = arith.constant 0 : index
    %c0_7 = arith.constant 0 : index
    %9 = vector.load %arg4[%c0_6, %c0_7] : memref<128x128xbf16, #tpu.memory_space<vmem>>, vector<128x128xbf16>
    tpu.vector_store %arg4[%c0_6, %c0_7], %8 {strides = array<i32>} : memref<128x128xbf16, #tpu.memory_space<vmem>>, vector<128x128xbf16>,
    return
  }
  func.func @transform_0(%arg0: i32) -> (i32, i32) {
    %c0_i32 = arith.constant 0 : i32
    %c0_i32_0 = arith.constant 0 : i32
    return %arg0, %c0_i32 : i32, i32
  }
  func.func @transform_1(%arg0: i32) -> (i32, i32) {
    %c0_i32 = arith.constant 0 : i32
    %c0_i32_0 = arith.constant 0 : i32
    %c0_i32_1 = arith.constant 0 : i32
    return %c0_i32, %c0_i32_0 : i32, i32
  }
  func.func @transform_2(%arg0: i32) -> (i32, i32) {
    %c0_i32 = arith.constant 0 : i32
    %c0_i32_0 = arith.constant 0 : i32
    %c0_i32_1 = arith.constant 0 : i32
    return %c0_i32, %c0_i32_0 : i32, i32
  }
  func.func @transform_3(%arg0: i32) -> (i32, i32) {
    %c0_i32 = arith.constant 0 : i32
    %c0_i32_0 = arith.constant 0 : i32
    return %arg0, %c0_i32 : i32, i32
  }
}

module attributes {stable_mosaic.version = 11 : i64} {
  func.func @_conv_bn_proj_add_relu_kernel(%arg0: i32, %arg1: memref<128x72xbf16, #tpu.memory_space<vmem>>, %arg2: memref<72x128xbf16, #tpu.memory_space<vmem>>, %arg3: memref<1x128xf32, #tpu.memory_space<vmem>>, %arg4: memref<128x4xbf16, #tpu.memory_space<vmem>>, %arg5: memref<4x128xbf16, #tpu.memory_space<vmem>>, %arg6: memref<1x128xf32, #tpu.memory_space<vmem>>, %arg7: memref<128x128xf32, #tpu.memory_space<vmem>>) attributes {dimension_semantics = [#tpu.dimension_semantics<parallel>], iteration_bounds = array<i64: 1>, scalar_prefetch = 0 : i64, scratch_operands = 0 : i64, tpu.core_type = #tpu.core_type<tc>, window_params = [{transform_indices = @transform_0, window_bounds = array<i64: 128, 72>}, {pipeline_mode = #tpu.pipeline_mode<synchronous>, transform_indices = @transform_1, window_bounds = array<i64: 72, 128>}, {pipeline_mode = #tpu.pipeline_mode<synchronous>, transform_indices = @transform_2, window_bounds = array<i64: 1, 128>}, {transform_indices = @transform_3, window_bounds = array<i64: 128, 4>}, {pipeline_mode = #tpu.pipeline_mode<synchronous>, transform_indices = @transform_4, window_bounds = array<i64: 4, 128>}, {pipeline_mode = #tpu.pipeline_mode<synchronous>, transform_indices = @transform_5, window_bounds = array<i64: 1, 128>}, {transform_indices = @transform_6, window_bounds = array<i64: 128, 128>}]} {
    %c0 = arith.constant 0 : index
    %c0_0 = arith.constant 0 : index
    %0 = vector.load %arg1[%c0, %c0_0] : memref<128x72xbf16, #tpu.memory_space<vmem>>, vector<128x72xbf16>
    %c0_1 = arith.constant 0 : index
    %c0_2 = arith.constant 0 : index
    %1 = vector.load %arg2[%c0_1, %c0_2] : memref<72x128xbf16, #tpu.memory_space<vmem>>, vector<72x128xbf16>
    %cst = arith.constant dense<0.000000e+00> : vector<128x128xf32>
    %2 = tpu.matmul %0, %1, %cst {dimension_numbers = #tpu.dot_dimension_numbers<[1], [0], [0], [1], [0, 0, 1, 1], [], []>} : vector<128x72xbf16>, vector<72x128xbf16>, vector<128x128xf32> -> vector<128x128xf32>
    %c0_3 = arith.constant 0 : index
    %c0_4 = arith.constant 0 : index
    %3 = vector.load %arg3[%c0_3, %c0_4] : memref<1x128xf32, #tpu.memory_space<vmem>>, vector<1x128xf32>
    %4 = vector.broadcast %3 : vector<1x128xf32> to vector<128x128xf32>
    %5 = arith.addf %2, %4 : vector<128x128xf32>
    %c0_5 = arith.constant 0 : index
    %c0_6 = arith.constant 0 : index
    %6 = vector.load %arg4[%c0_5, %c0_6] : memref<128x4xbf16, #tpu.memory_space<vmem>>, vector<128x4xbf16>
    %c0_7 = arith.constant 0 : index
    %c0_8 = arith.constant 0 : index
    %7 = vector.load %arg5[%c0_7, %c0_8] : memref<4x128xbf16, #tpu.memory_space<vmem>>, vector<4x128xbf16>
    %cst_9 = arith.constant dense<0.000000e+00> : vector<128x128xf32>
    %8 = tpu.matmul %6, %7, %cst_9 {dimension_numbers = #tpu.dot_dimension_numbers<[1], [0], [0], [1], [0, 0, 1, 1], [], []>} : vector<128x4xbf16>, vector<4x128xbf16>, vector<128x128xf32> -> vector<128x128xf32>
    %c0_10 = arith.constant 0 : index
    %c0_11 = arith.constant 0 : index
    %9 = vector.load %arg6[%c0_10, %c0_11] : memref<1x128xf32, #tpu.memory_space<vmem>>, vector<1x128xf32>
    %10 = vector.broadcast %9 : vector<1x128xf32> to vector<128x128xf32>
    %11 = arith.addf %8, %10 : vector<128x128xf32>
    %12 = arith.addf %5, %11 : vector<128x128xf32>
    %cst_12 = arith.constant 0.000000e+00 : f32
    %13 = vector.broadcast %cst_12 : f32 to vector<128x128xf32>
    %14 = arith.maximumf %12, %13 : vector<128x128xf32>
    %c0_13 = arith.constant 0 : index
    %c0_14 = arith.constant 0 : index
    %15 = vector.load %arg7[%c0_13, %c0_14] : memref<128x128xf32, #tpu.memory_space<vmem>>, vector<128x128xf32>
    tpu.vector_store %arg7[%c0_13, %c0_14], %14 {strides = array<i32>} : memref<128x128xf32, #tpu.memory_space<vmem>>, vector<128x128xf32>,
    return
  }
  func.func @transform_0(%arg0: i32) -> (i32, i32) {
    %c0_i32 = arith.constant 0 : i32
    %c0_i32_0 = arith.constant 0 : i32
    return %arg0, %c0_i32 : i32, i32
  }
  func.func @transform_1(%arg0: i32) -> (i32, i32) {
    %c0_i32 = arith.constant 0 : i32
    %c0_i32_0 = arith.constant 0 : i32
    %c0_i32_1 = arith.constant 0 : i32
    return %c0_i32, %c0_i32_0 : i32, i32
  }
  func.func @transform_2(%arg0: i32) -> (i32, i32) {
    %c0_i32 = arith.constant 0 : i32
    %c0_i32_0 = arith.constant 0 : i32
    %c0_i32_1 = arith.constant 0 : i32
    return %c0_i32, %c0_i32_0 : i32, i32
  }
  func.func @transform_3(%arg0: i32) -> (i32, i32) {
    %c0_i32 = arith.constant 0 : i32
    %c0_i32_0 = arith.constant 0 : i32
    return %arg0, %c0_i32 : i32, i32
  }
  func.func @transform_4(%arg0: i32) -> (i32, i32) {
    %c0_i32 = arith.constant 0 : i32
    %c0_i32_0 = arith.constant 0 : i32
    %c0_i32_1 = arith.constant 0 : i32
    return %c0_i32, %c0_i32_0 : i32, i32
  }
  func.func @transform_5(%arg0: i32) -> (i32, i32) {
    %c0_i32 = arith.constant 0 : i32
    %c0_i32_0 = arith.constant 0 : i32
    %c0_i32_1 = arith.constant 0 : i32
    return %c0_i32, %c0_i32_0 : i32, i32
  }
  func.func @transform_6(%arg0: i32) -> (i32, i32) {
    %c0_i32 = arith.constant 0 : i32
    %c0_i32_0 = arith.constant 0 : i32
    return %arg0, %c0_i32 : i32, i32
  }
}

</mosaic_0001>

<llo_original>
// kernel: basic_block_forward.2
$region0: #{basic_block_forward.2}
  #allocation0 [shape = 'u32[]', space=smem, size = 0x4, offset = 0x4, fixed_abs, tag = 'smem constant byte address 0x4 - core index']
  #allocation1 [shape = 'u32[144,128]{1,0:T(1,128)}', space=vmem, size = 0x12000, scoped, tag = 'internal scratch']
  %s0 = inlined_call_operand.vmem [shape: bf16[128,36], index: 0, kind: input, shape index: {}]
  %s1 = inlined_call_operand.vmem [shape: bf16[36,128], index: 1, kind: input, shape index: {}]
  %s2 = inlined_call_operand.vmem [shape: f32[1,128], index: 2, kind: input, shape index: {}]
  %s3 = inlined_call_operand.vmem [shape: bf16[128,128], index: 3, kind: output, shape index: {}]
  %s4 = sld [smem:[#allocation0]]
  $region22: #{basic_block_forward.2} parent=0
    _
  %s6 = ssub.s32 1, %s4
  %s7 = scalar_select 0, %s6, %s4
  // Predicated region
  $region2: #{basic_block_forward.2} parent=0 // pred_check
    _
  $region3: #{basic_block_forward.2} parent=0 // pred_check_branch
    %9 = sbr.rel (0) target = $region5
  $region4: #{basic_block_forward.2} parent=0 // pred_region
    _
  $region5: #{basic_block_forward.2} parent=0 // pred_fallthru
    _
  // Predicated region
  $region6: #{basic_block_forward.2} parent=0 // pred_check
    _
  $region7: #{basic_block_forward.2} parent=0 // pred_check_branch
    %11 = sbr.rel (0) target = $region9
  $region8: #{basic_block_forward.2} parent=0 // pred_region
    _
  $region9: #{basic_block_forward.2} parent=0 // pred_fallthru
    _
  // Predicated region
  $region10: #{basic_block_forward.2} parent=0 // pred_check
    _
  $region11: #{basic_block_forward.2} parent=0 // pred_check_branch
    %13 = sbr.rel (0) target = $region13
  $region12: #{basic_block_forward.2} parent=0 // pred_region
    _
  $region13: #{basic_block_forward.2} parent=0 // pred_fallthru
    _
  %v15 = vld [vmem:[%s0] sm:$0xf]
  %v16 = vld [vmem:[%s0 + $0x4] sm:$0xf]
  %v17 = vld [vmem:[%s0 + $0x8] sm:$0xf]
  %v18 = vld [vmem:[%s0 + $0xc] sm:$0xf]
  %v19 = vld [vmem:[%s0 + $0x10] sm:$0xf]
  %v20 = vld [vmem:[%s0 + $0x14] sm:$0xf]
  %v21 = vld [vmem:[%s0 + $0x18] sm:$0xf]
  %v22 = vld [vmem:[%s0 + $0x1c] sm:$0xf]
  %v23 = vld [vmem:[%s0 + $0x20] sm:$0xf]
  %v24 = vld [vmem:[%s0 + $0x24] sm:$0xf]
  %v25 = vld [vmem:[%s0 + $0x28] sm:$0xf]
  %v26 = vld [vmem:[%s0 + $0x2c] sm:$0xf]
  %v27 = vld [vmem:[%s0 + $0x30] sm:$0xf]
  %v28 = vld [vmem:[%s0 + $0x34] sm:$0xf]
  %v29 = vld [vmem:[%s0 + $0x38] sm:$0xf]
  %v30 = vld [vmem:[%s0 + $0x3c] sm:$0xf]
  %v31 = vld [vmem:[%s1] sm:$0xf]
  %v32 = vld [vmem:[%s1 + $0x4] sm:$0xf]
  %v33 = vld [vmem:[%s1 + $0x8] sm:$0xf]
  %v34 = vld [vmem:[%s1 + $0xc] sm:$0xf]
  %v35 = vld [vmem:[%s1 + $0x10] sm:$0x3]
  %v36 = vld [vmem:[%s2] sm:$0x1]
  %v38 = vlaneseq
  %v39 = vshrl.u32 %v38, 7
  %v40 = vsub.s32 0, %v39
  %v41 = vrot.slane %v36, %v40
  %v59 = vunpack.c.l.b16 %v15
  %v60 = vunpack.c.l.b16 %v16
  %v61 = vunpack.c.l.b16 %v17
  %v62 = vunpack.c.l.b16 %v18
  %v63 = vunpack.c.l.b16 %v19
  %v64 = vunpack.c.l.b16 %v20
  %v65 = vunpack.c.l.b16 %v21
  %v66 = vunpack.c.l.b16 %v22
  %v67 = vunpack.c.l.b16 %v23
  %v68 = vunpack.c.l.b16 %v24
  %v69 = vunpack.c.l.b16 %v25
  %v70 = vunpack.c.l.b16 %v26
  %v71 = vunpack.c.l.b16 %v27
  %v72 = vunpack.c.l.b16 %v28
  %v73 = vunpack.c.l.b16 %v29
  %v74 = vunpack.c.l.b16 %v30
  %v75 = vpack.c.b16 %v60, %v59
  %v76 = vpack.c.b16 %v62, %v61
  %v77 = vpack.c.b16 %v64, %v63
  %v78 = vpack.c.b16 %v66, %v65
  %v79 = vpack.c.b16 %v68, %v67
  %v80 = vpack.c.b16 %v70, %v69
  %v81 = vpack.c.b16 %v72, %v71
  %v82 = vpack.c.b16 %v74, %v73
  %v88 = vunpack.c.l.b16 %v31
  %v89 = vunpack.c.l.b16 %v32
  %v90 = vunpack.c.l.b16 %v33
  %v91 = vunpack.c.l.b16 %v34
  %v92 = vunpack.c.l.b16 %v35
  %v93 = vpack.c.b16 %v89, %v88
  %v94 = vpack.c.b16 %v91, %v90
  %v95 = vpack.c.b16 %v92, %v92
  %vm98 = vcmask 293888
  %v100 = vsel %vm98, %v75, 0
  %v103 = vsel %vm98, %v76, 0
  %v106 = vsel %vm98, %v77, 0
  %v109 = vsel %vm98, %v78, 0
  %v112 = vsel %vm98, %v79, 0
  %v115 = vsel %vm98, %v80, 0
  %v118 = vsel %vm98, %v81, 0
  %v121 = vsel %vm98, %v82, 0
  %vm123 = vcmask 1041408
  %v125 = vsel %vm123, %v95, 0
  %127 = vmatprep.subr.bf16.mxu0 0
  %128 = vmatpush1.bf16.msra.mxu0 %v93
  %129 = vmatprep.subr.bf16.mxu0 0
  %130 = vmatpush1.bf16.msra.mxu0 %v94
  %131 = vmatprep.subr.bf16.mxu0 0
  %132 = vmatpush1.bf16.msra.mxu0 %v125
  %133 = vmatprep.subr.bf16.mxu0 0
  %134 = vmatpush1.bf16.msra.mxu0 0
  %135 = vmatprep.subr.bf16.mxu0 0
  %136 = vmatpush1.bf16.msra.mxu0 0
  %137 = vmatprep.subr.bf16.mxu0 0
  %138 = vmatpush1.bf16.msra.mxu0 0
  %139 = vmatprep.subr.bf16.mxu0 0
  %140 = vmatpush1.bf16.msra.mxu0 0
  %141 = vmatprep.subr.bf16.mxu0 0
  %142 = vmatpush1.bf16.msra.mxu0 0
  %143 = vmatprep.subr.bf16.mxu0 0
  %144 = vmatpush1.bf16.msra.mxu0 0
  %145 = vmatprep.subr.bf16.mxu0 0
  %146 = vmatpush1.bf16.msra.mxu0 0
  %147 = vmatprep.subr.bf16.mxu0 0
  %148 = vmatpush1.bf16.msra.mxu0 0
  %149 = vmatprep.subr.bf16.mxu0 0
  %150 = vmatpush1.bf16.msra.mxu0 0
  %151 = vmatprep.subr.bf16.mxu0 0
  %152 = vmatpush1.bf16.msra.mxu0 0
  %153 = vmatprep.subr.bf16.mxu0 0
  %154 = vmatpush1.bf16.msra.mxu0 0
  %155 = vmatprep.subr.bf16.mxu0 0
  %156 = vmatpush1.bf16.msra.mxu0 0
  %157 = vmatprep.subr.bf16.mxu0 0
  %158 = vmatpush1.bf16.msra.mxu0 0
  %159 = vmatprep.mubr.bf16.mxu0 0
  %160 = vmatmul.mubr.bf16.gmra.mrb[0].mxu0 %v100
  %v161 = vpop.f32.mrb[0].mxu0
  %v162 = vadd.f32 %v41, %v161
  %v163 = vpop.f32.mrb[0].mxu0
  %v164 = vpop.f32.mrb[0].mxu0
  %v165 = vadd.f32 %v41, %v164
  %v166 = vpop.f32.mrb[0].mxu0
  %167 = vmatprep.mubr.bf16.mxu0 0
  %168 = vmatmul.mubr.bf16.gmra.mrb[0].mxu0 %v103
  %v169 = vpop.f32.mrb[0].mxu0
  %v170 = vadd.f32 %v41, %v169
  %v171 = vpop.f32.mrb[0].mxu0
  %v172 = vpop.f32.mrb[0].mxu0
  %v173 = vadd.f32 %v41, %v172
  %v174 = vpop.f32.mrb[0].mxu0
  %175 = vmatprep.mubr.bf16.mxu0 0
  %176 = vmatmul.mubr.bf16.gmra.mrb[0].mxu0 %v106
  %v177 = vpop.f32.mrb[0].mxu0
  %v178 = vadd.f32 %v41, %v177
  %v179 = vpop.f32.mrb[0].mxu0
  %v180 = vpop.f32.mrb[0].mxu0
  %v181 = vadd.f32 %v41, %v180
  %v182 = vpop.f32.mrb[0].mxu0
  %183 = vmatprep.mubr.bf16.mxu0 0
  %184 = vmatmul.mubr.bf16.gmra.mrb[0].mxu0 %v109
  %v185 = vpop.f32.mrb[0].mxu0
  %v186 = vadd.f32 %v41, %v185
  %v187 = vpop.f32.mrb[0].mxu0
  %v188 = vpop.f32.mrb[0].mxu0
  %v189 = vadd.f32 %v41, %v188
  %v190 = vpop.f32.mrb[0].mxu0
  %191 = vmatprep.mubr.bf16.mxu0 0
  %192 = vmatmul.mubr.bf16.gmra.mrb[0].mxu0 %v112
  %v193 = vpop.f32.mrb[0].mxu0
  %v194 = vadd.f32 %v41, %v193
  %v195 = vpop.f32.mrb[0].mxu0
  %v196 = vpop.f32.mrb[0].mxu0
  %v197 = vadd.f32 %v41, %v196
  %v198 = vpop.f32.mrb[0].mxu0
  %199 = vmatprep.mubr.bf16.mxu0 0
  %200 = vmatmul.mubr.bf16.gmra.mrb[0].mxu0 %v115
  %v201 = vpop.f32.mrb[0].mxu0
  %v202 = vadd.f32 %v41, %v201
  %v203 = vpop.f32.mrb[0].mxu0
  %v204 = vpop.f32.mrb[0].mxu0
  %v205 = vadd.f32 %v41, %v204
  %v206 = vpop.f32.mrb[0].mxu0
  %207 = vmatprep.mubr.bf16.mxu0 0
  %208 = vmatmul.mubr.bf16.gmra.mrb[0].mxu0 %v118
  %v209 = vpop.f32.mrb[0].mxu0
  %v210 = vadd.f32 %v41, %v209
  %v211 = vpop.f32.mrb[0].mxu0
  %v212 = vpop.f32.mrb[0].mxu0
  %v213 = vadd.f32 %v41, %v212
  %v214 = vpop.f32.mrb[0].mxu0
  %215 = vmatprep.mubr.bf16.mxu0 0
  %216 = vmatmul.mubr.bf16.gmra.mrb[0].mxu0 %v121
  %v217 = vpop.f32.mrb[0].mxu0
  %v218 = vadd.f32 %v41, %v217
  %v219 = vpop.f32.mrb[0].mxu0
  %v220 = vpop.f32.mrb[0].mxu0
  %v221 = vadd.f32 %v41, %v220
  %v222 = vpop.f32.mrb[0].mxu0
  %223 = vdwg.mxu0
  %v224 = vmax.f32 %v162, 0.0
  %v225 = vmax.f32 %v165, 0.0
  %v226 = vmax.f32 %v170, 0.0
  %v227 = vmax.f32 %v173, 0.0
  %v228 = vmax.f32 %v178, 0.0
  %v229 = vmax.f32 %v181, 0.0
  %v230 = vmax.f32 %v186, 0.0
  %v231 = vmax.f32 %v189, 0.0
  %v232 = vmax.f32 %v194, 0.0
  %v233 = vmax.f32 %v197, 0.0
  %v234 = vmax.f32 %v202, 0.0
  %v235 = vmax.f32 %v205, 0.0
  %v236 = vmax.f32 %v210, 0.0
  %v237 = vmax.f32 %v213, 0.0
  %v238 = vmax.f32 %v218, 0.0
  %v239 = vmax.f32 %v221, 0.0
  %v240 = vpack.c.bf16 %v225, %v224
  %v241 = vpack.c.bf16 %v227, %v226
  %v242 = vpack.c.bf16 %v229, %v228
  %v243 = vpack.c.bf16 %v231, %v230
  %v244 = vpack.c.bf16 %v233, %v232
  %v245 = vpack.c.bf16 %v235, %v234
  %v246 = vpack.c.bf16 %v237, %v236
  %v247 = vpack.c.bf16 %v239, %v238
  %v256 = vunpack.c.l.b16 %v240
  %v257 = vunpack.c.h.b16 %v240
  %v258 = vunpack.c.l.b16 %v241
  %v259 = vunpack.c.h.b16 %v241
  %v260 = vunpack.c.l.b16 %v242
  %v261 = vunpack.c.h.b16 %v242
  %v262 = vunpack.c.l.b16 %v243
  %v263 = vunpack.c.h.b16 %v243
  %v264 = vunpack.c.l.b16 %v244
  %v265 = vunpack.c.h.b16 %v244
  %v266 = vunpack.c.l.b16 %v245
  %v267 = vunpack.c.h.b16 %v245
  %v268 = vunpack.c.l.b16 %v246
  %v269 = vunpack.c.h.b16 %v246
  %v270 = vunpack.c.l.b16 %v247
  %v271 = vunpack.c.h.b16 %v247
  %v272 = vpack.c.b16 %v256, %v256
  %v273 = vpack.c.b16 %v257, %v257
  %v274 = vpack.c.b16 %v258, %v258
  %v275 = vpack.c.b16 %v259, %v259
  %v276 = vpack.c.b16 %v260, %v260
  %v277 = vpack.c.b16 %v261, %v261
  %v278 = vpack.c.b16 %v262, %v262
  %v279 = vpack.c.b16 %v263, %v263
  %v280 = vpack.c.b16 %v264, %v264
  %v281 = vpack.c.b16 %v265, %v265
  %v282 = vpack.c.b16 %v266, %v266
  %v283 = vpack.c.b16 %v267, %v267
  %v284 = vpack.c.b16 %v268, %v268
  %v285 = vpack.c.b16 %v269, %v269
  %v286 = vpack.c.b16 %v270, %v270
  %v287 = vpack.c.b16 %v271, %v271
  %304 = vst [vmem:[%s3] sm:$0xf] %v272
  %305 = vst [vmem:[%s3 + $0x4] sm:$0xf] %v273
  %306 = vst [vmem:[%s3 + $0x8] sm:$0xf] %v274
  %307 = vst [vmem:[%s3 + $0xc] sm:$0xf] %v275
  %308 = vst [vmem:[%s3 + $0x10] sm:$0xf] %v276
  %309 = vst [vmem:[%s3 + $0x14] sm:$0xf] %v277
  %310 = vst [vmem:[%s3 + $0x18] sm:$0xf] %v278
  %311 = vst [vmem:[%s3 + $0x1c] sm:$0xf] %v279
  %312 = vst [vmem:[%s3 + $0x20] sm:$0xf] %v280
  %313 = vst [vmem:[%s3 + $0x24] sm:$0xf] %v281
  %314 = vst [vmem:[%s3 + $0x28] sm:$0xf] %v282
  %315 = vst [vmem:[%s3 + $0x2c] sm:$0xf] %v283
  %316 = vst [vmem:[%s3 + $0x30] sm:$0xf] %v284
  %317 = vst [vmem:[%s3 + $0x34] sm:$0xf] %v285
  %318 = vst [vmem:[%s3 + $0x38] sm:$0xf] %v286
  %319 = vst [vmem:[%s3 + $0x3c] sm:$0xf] %v287
  // Predicated region
  $region14: #{basic_block_forward.2} parent=0 // pred_check
    _
  $region15: #{basic_block_forward.2} parent=0 // pred_check_branch
    %321 = sbr.rel (0) target = $region17
  $region16: #{basic_block_forward.2} parent=0 // pred_region
    _
  $region17: #{basic_block_forward.2} parent=0 // pred_fallthru
    _
  // Predicated region
  $region18: #{basic_block_forward.2} parent=0 // pred_check
    _
  $region19: #{basic_block_forward.2} parent=0 // pred_check_branch
    %323 = sbr.rel (0) target = $region21
  $region20: #{basic_block_forward.2} parent=0 // pred_region
    _
  $region21: #{basic_block_forward.2} parent=0 // pred_fallthru
    _

// kernel: basic_block_forward.3
$region0: #{basic_block_forward.3}
  #allocation0 [shape = 'u32[]', space=smem, size = 0x4, offset = 0x4, fixed_abs, tag = 'smem constant byte address 0x4 - core index']
  #allocation1 [shape = 'u32[144,128]{1,0:T(1,128)}', space=vmem, size = 0x12000, scoped, tag = 'internal scratch']
  %s0 = inlined_call_operand.vmem [shape: bf16[128,72], index: 0, kind: input, shape index: {}]
  %s1 = inlined_call_operand.vmem [shape: bf16[72,128], index: 1, kind: input, shape index: {}]
  %s2 = inlined_call_operand.vmem [shape: f32[1,128], index: 2, kind: input, shape index: {}]
  %s3 = inlined_call_operand.vmem [shape: bf16[128,4], index: 3, kind: input, shape index: {}]
  %s4 = inlined_call_operand.vmem [shape: bf16[4,128], index: 4, kind: input, shape index: {}]
  %s5 = inlined_call_operand.vmem [shape: f32[1,128], index: 5, kind: input, shape index: {}]
  %s6 = inlined_call_operand.vmem [shape: f32[128,128], index: 6, kind: output, shape index: {}]
  %s7 = sld [smem:[#allocation0]]
  $region34: #{basic_block_forward.3} parent=0
    _
  %s9 = ssub.s32 1, %s7
  %s10 = scalar_select 0, %s9, %s7
  // Predicated region
  $region2: #{basic_block_forward.3} parent=0 // pred_check
    _
  $region3: #{basic_block_forward.3} parent=0 // pred_check_branch
    %12 = sbr.rel (0) target = $region5
  $region4: #{basic_block_forward.3} parent=0 // pred_region
    _
  $region5: #{basic_block_forward.3} parent=0 // pred_fallthru
    _
  // Predicated region
  $region6: #{basic_block_forward.3} parent=0 // pred_check
    _
  $region7: #{basic_block_forward.3} parent=0 // pred_check_branch
    %14 = sbr.rel (0) target = $region9
  $region8: #{basic_block_forward.3} parent=0 // pred_region
    _
  $region9: #{basic_block_forward.3} parent=0 // pred_fallthru
    _
  // Predicated region
  $region10: #{basic_block_forward.3} parent=0 // pred_check
    _
  $region11: #{basic_block_forward.3} parent=0 // pred_check_branch
    %16 = sbr.rel (0) target = $region13
  $region12: #{basic_block_forward.3} parent=0 // pred_region
    _
  $region13: #{basic_block_forward.3} parent=0 // pred_fallthru
    _
  // Predicated region
  $region14: #{basic_block_forward.3} parent=0 // pred_check
    _
  $region15: #{basic_block_forward.3} parent=0 // pred_check_branch
    %18 = sbr.rel (0) target = $region17
  $region16: #{basic_block_forward.3} parent=0 // pred_region
    _
  $region17: #{basic_block_forward.3} parent=0 // pred_fallthru
    _
  // Predicated region
  $region18: #{basic_block_forward.3} parent=0 // pred_check
    _
  $region19: #{basic_block_forward.3} parent=0 // pred_check_branch
    %20 = sbr.rel (0) target = $region21
  $region20: #{basic_block_forward.3} parent=0 // pred_region
    _
  $region21: #{basic_block_forward.3} parent=0 // pred_fallthru
    _
  // Predicated region
  $region22: #{basic_block_forward.3} parent=0 // pred_check
    _
  $region23: #{basic_block_forward.3} parent=0 // pred_check_branch
    %22 = sbr.rel (0) target = $region25
  $region24: #{basic_block_forward.3} parent=0 // pred_region
    _
  $region25: #{basic_block_forward.3} parent=0 // pred_fallthru
    _
  %v24 = vld [vmem:[%s0] sm:$0xf]
  %v25 = vld [vmem:[%s0 + $0x4] sm:$0xf]
  %v26 = vld [vmem:[%s0 + $0x8] sm:$0xf]
  %v27 = vld [vmem:[%s0 + $0xc] sm:$0xf]
  %v28 = vld [vmem:[%s0 + $0x10] sm:$0xf]
  %v29 = vld [vmem:[%s0 + $0x14] sm:$0xf]
  %v30 = vld [vmem:[%s0 + $0x18] sm:$0xf]
  %v31 = vld [vmem:[%s0 + $0x1c] sm:$0xf]
  %v32 = vld [vmem:[%s0 + $0x20] sm:$0xf]
  %v33 = vld [vmem:[%s0 + $0x24] sm:$0xf]
  %v34 = vld [vmem:[%s0 + $0x28] sm:$0xf]
  %v35 = vld [vmem:[%s0 + $0x2c] sm:$0xf]
  %v36 = vld [vmem:[%s0 + $0x30] sm:$0xf]
  %v37 = vld [vmem:[%s0 + $0x34] sm:$0xf]
  %v38 = vld [vmem:[%s0 + $0x38] sm:$0xf]
  %v39 = vld [vmem:[%s0 + $0x3c] sm:$0xf]
  %v40 = vld [vmem:[%s1] sm:$0xf]
  %v41 = vld [vmem:[%s1 + $0x4] sm:$0xf]
  %v42 = vld [vmem:[%s1 + $0x8] sm:$0xf]
  %v43 = vld [vmem:[%s1 + $0xc] sm:$0xf]
  %v44 = vld [vmem:[%s1 + $0x10] sm:$0xf]
  %v45 = vld [vmem:[%s1 + $0x14] sm:$0xf]
  %v46 = vld [vmem:[%s1 + $0x18] sm:$0xf]
  %v47 = vld [vmem:[%s1 + $0x1c] sm:$0xf]
  %v48 = vld [vmem:[%s1 + $0x20] sm:$0xf]
  %v49 = vld [vmem:[%s2] sm:$0x1]
  %v51 = vlaneseq
  %v52 = vshrl.u32 %v51, 7
  %v53 = vsub.s32 0, %v52
  %v54 = vrot.slane %v49, %v53
  %v72 = vunpack.c.l.b16 %v24
  %v73 = vunpack.c.l.b16 %v25
  %v74 = vunpack.c.l.b16 %v26
  %v75 = vunpack.c.l.b16 %v27
  %v76 = vunpack.c.l.b16 %v28
  %v77 = vunpack.c.l.b16 %v29
  %v78 = vunpack.c.l.b16 %v30
  %v79 = vunpack.c.l.b16 %v31
  %v80 = vunpack.c.l.b16 %v32
  %v81 = vunpack.c.l.b16 %v33
  %v82 = vunpack.c.l.b16 %v34
  %v83 = vunpack.c.l.b16 %v35
  %v84 = vunpack.c.l.b16 %v36
  %v85 = vunpack.c.l.b16 %v37
  %v86 = vunpack.c.l.b16 %v38
  %v87 = vunpack.c.l.b16 %v39
  %v88 = vpack.c.b16 %v73, %v72
  %v89 = vpack.c.b16 %v75, %v74
  %v90 = vpack.c.b16 %v77, %v76
  %v91 = vpack.c.b16 %v79, %v78
  %v92 = vpack.c.b16 %v81, %v80
  %v93 = vpack.c.b16 %v83, %v82
  %v94 = vpack.c.b16 %v85, %v84
  %v95 = vpack.c.b16 %v87, %v86
  %v105 = vunpack.c.l.b16 %v40
  %v106 = vunpack.c.l.b16 %v41
  %v107 = vunpack.c.l.b16 %v42
  %v108 = vunpack.c.l.b16 %v43
  %v109 = vunpack.c.l.b16 %v44
  %v110 = vunpack.c.l.b16 %v45
  %v111 = vunpack.c.l.b16 %v46
  %v112 = vunpack.c.l.b16 %v47
  %v113 = vunpack.c.l.b16 %v48
  %v114 = vpack.c.b16 %v106, %v105
  %v115 = vpack.c.b16 %v108, %v107
  %v116 = vpack.c.b16 %v110, %v109
  %v117 = vpack.c.b16 %v112, %v111
  %v118 = vpack.c.b16 %v113, %v113
  %vm123 = vcmask 588800
  %v125 = vsel %vm123, %v88, 0
  %v128 = vsel %vm123, %v89, 0
  %v131 = vsel %vm123, %v90, 0
  %v134 = vsel %vm123, %v91, 0
  %v137 = vsel %vm123, %v92, 0
  %v140 = vsel %vm123, %v93, 0
  %v143 = vsel %vm123, %v94, 0
  %v146 = vsel %vm123, %v95, 0
  %vm148 = vcmask 1043456
  %v150 = vsel %vm148, %v118, 0
  %152 = vmatprep.subr.bf16.mxu0 0
  %153 = vmatpush1.bf16.msra.mxu0 %v114
  %154 = vmatprep.subr.bf16.mxu0 0
  %155 = vmatpush1.bf16.msra.mxu0 %v115
  %156 = vmatprep.subr.bf16.mxu0 0
  %157 = vmatpush1.bf16.msra.mxu0 %v116
  %158 = vmatprep.subr.bf16.mxu0 0
  %159 = vmatpush1.bf16.msra.mxu0 %v117
  %160 = vmatprep.subr.bf16.mxu0 0
  %161 = vmatpush1.bf16.msra.mxu0 %v150
  %162 = vmatprep.subr.bf16.mxu0 0
  %163 = vmatpush1.bf16.msra.mxu0 0
  %164 = vmatprep.subr.bf16.mxu0 0
  %165 = vmatpush1.bf16.msra.mxu0 0
  %166 = vmatprep.subr.bf16.mxu0 0
  %167 = vmatpush1.bf16.msra.mxu0 0
  %168 = vmatprep.subr.bf16.mxu0 0
  %169 = vmatpush1.bf16.msra.mxu0 0
  %170 = vmatprep.subr.bf16.mxu0 0
  %171 = vmatpush1.bf16.msra.mxu0 0
  %172 = vmatprep.subr.bf16.mxu0 0
  %173 = vmatpush1.bf16.msra.mxu0 0
  %174 = vmatprep.subr.bf16.mxu0 0
  %175 = vmatpush1.bf16.msra.mxu0 0
  %176 = vmatprep.subr.bf16.mxu0 0
  %177 = vmatpush1.bf16.msra.mxu0 0
  %178 = vmatprep.subr.bf16.mxu0 0
  %179 = vmatpush1.bf16.msra.mxu0 0
  %180 = vmatprep.subr.bf16.mxu0 0
  %181 = vmatpush1.bf16.msra.mxu0 0
  %182 = vmatprep.subr.bf16.mxu0 0
  %183 = vmatpush1.bf16.msra.mxu0 0
  %184 = vmatprep.mubr.bf16.mxu0 0
  %185 = vmatmul.mubr.bf16.gmra.mrb[0].mxu0 %v125
  %v186 = vpop.f32.mrb[0].mxu0
  %v187 = vadd.f32 %v54, %v186
  %v188 = vpop.f32.mrb[0].mxu0
  %v189 = vpop.f32.mrb[0].mxu0
  %v190 = vadd.f32 %v54, %v189
  %v191 = vpop.f32.mrb[0].mxu0
  %192 = vmatprep.mubr.bf16.mxu0 0
  %193 = vmatmul.mubr.bf16.gmra.mrb[0].mxu0 %v128
  %v194 = vpop.f32.mrb[0].mxu0
  %v195 = vadd.f32 %v54, %v194
  %v196 = vpop.f32.mrb[0].mxu0
  %v197 = vpop.f32.mrb[0].mxu0
  %v198 = vadd.f32 %v54, %v197
  %v199 = vpop.f32.mrb[0].mxu0
  %200 = vmatprep.mubr.bf16.mxu0 0
  %201 = vmatmul.mubr.bf16.gmra.mrb[0].mxu0 %v131
  %v202 = vpop.f32.mrb[0].mxu0
  %v203 = vadd.f32 %v54, %v202
  %v204 = vpop.f32.mrb[0].mxu0
  %v205 = vpop.f32.mrb[0].mxu0
  %v206 = vadd.f32 %v54, %v205
  %v207 = vpop.f32.mrb[0].mxu0
  %208 = vmatprep.mubr.bf16.mxu0 0
  %209 = vmatmul.mubr.bf16.gmra.mrb[0].mxu0 %v134
  %v210 = vpop.f32.mrb[0].mxu0
  %v211 = vadd.f32 %v54, %v210
  %v212 = vpop.f32.mrb[0].mxu0
  %v213 = vpop.f32.mrb[0].mxu0
  %v214 = vadd.f32 %v54, %v213
  %v215 = vpop.f32.mrb[0].mxu0
  %216 = vmatprep.mubr.bf16.mxu0 0
  %217 = vmatmul.mubr.bf16.gmra.mrb[0].mxu0 %v137
  %v218 = vpop.f32.mrb[0].mxu0
  %v219 = vadd.f32 %v54, %v218
  %v220 = vpop.f32.mrb[0].mxu0
  %v221 = vpop.f32.mrb[0].mxu0
  %v222 = vadd.f32 %v54, %v221
  %v223 = vpop.f32.mrb[0].mxu0
  %224 = vmatprep.mubr.bf16.mxu0 0
  %225 = vmatmul.mubr.bf16.gmra.mrb[0].mxu0 %v140
  %v226 = vpop.f32.mrb[0].mxu0
  %v227 = vadd.f32 %v54, %v226
  %v228 = vpop.f32.mrb[0].mxu0
  %v229 = vpop.f32.mrb[0].mxu0
  %v230 = vadd.f32 %v54, %v229
  %v231 = vpop.f32.mrb[0].mxu0
  %232 = vmatprep.mubr.bf16.mxu0 0
  %233 = vmatmul.mubr.bf16.gmra.mrb[0].mxu0 %v143
  %v234 = vpop.f32.mrb[0].mxu0
  %v235 = vadd.f32 %v54, %v234
  %v236 = vpop.f32.mrb[0].mxu0
  %v237 = vpop.f32.mrb[0].mxu0
  %v238 = vadd.f32 %v54, %v237
  %v239 = vpop.f32.mrb[0].mxu0
  %240 = vmatprep.mubr.bf16.mxu0 0
  %241 = vmatmul.mubr.bf16.gmra.mrb[0].mxu0 %v146
  %v242 = vpop.f32.mrb[0].mxu0
  %v243 = vadd.f32 %v54, %v242
  %v244 = vpop.f32.mrb[0].mxu0
  %v245 = vpop.f32.mrb[0].mxu0
  %v246 = vadd.f32 %v54, %v245
  %v247 = vpop.f32.mrb[0].mxu0
  %248 = vdwg.mxu0
  %v249 = vld [vmem:[%s3] sm:$0xf]
  %v250 = vld [vmem:[%s3 + $0x4] sm:$0xf]
  %v251 = vld [vmem:[%s3 + $0x8] sm:$0xf]
  %v252 = vld [vmem:[%s3 + $0xc] sm:$0xf]
  %v253 = vld [vmem:[%s3 + $0x10] sm:$0xf]
  %v254 = vld [vmem:[%s3 + $0x14] sm:$0xf]
  %v255 = vld [vmem:[%s3 + $0x18] sm:$0xf]
  %v256 = vld [vmem:[%s3 + $0x1c] sm:$0xf]
  %v257 = vld [vmem:[%s3 + $0x20] sm:$0xf]
  %v258 = vld [vmem:[%s3 + $0x24] sm:$0xf]
  %v259 = vld [vmem:[%s3 + $0x28] sm:$0xf]
  %v260 = vld [vmem:[%s3 + $0x2c] sm:$0xf]
  %v261 = vld [vmem:[%s3 + $0x30] sm:$0xf]
  %v262 = vld [vmem:[%s3 + $0x34] sm:$0xf]
  %v263 = vld [vmem:[%s3 + $0x38] sm:$0xf]
  %v264 = vld [vmem:[%s3 + $0x3c] sm:$0xf]
  %v265 = vld [vmem:[%s4] sm:$0x3]
  %v266 = vld [vmem:[%s5] sm:$0x1]
  %v268 = vlaneseq
  %v269 = vshrl.u32 %v268, 7
  %v270 = vsub.s32 0, %v269
  %v271 = vrot.slane %v266, %v270
  %v289 = vunpack.c.l.b16 %v249
  %v290 = vunpack.c.l.b16 %v250
  %v291 = vunpack.c.l.b16 %v251
  %v292 = vunpack.c.l.b16 %v252
  %v293 = vunpack.c.l.b16 %v253
  %v294 = vunpack.c.l.b16 %v254
  %v295 = vunpack.c.l.b16 %v255
  %v296 = vunpack.c.l.b16 %v256
  %v297 = vunpack.c.l.b16 %v257
  %v298 = vunpack.c.l.b16 %v258
  %v299 = vunpack.c.l.b16 %v259
  %v300 = vunpack.c.l.b16 %v260
  %v301 = vunpack.c.l.b16 %v261
  %v302 = vunpack.c.l.b16 %v262
  %v303 = vunpack.c.l.b16 %v263
  %v304 = vunpack.c.l.b16 %v264
  %v305 = vpack.c.b16 %v290, %v289
  %v306 = vpack.c.b16 %v292, %v291
  %v307 = vpack.c.b16 %v294, %v293
  %v308 = vpack.c.b16 %v296, %v295
  %v309 = vpack.c.b16 %v298, %v297
  %v310 = vpack.c.b16 %v300, %v299
  %v311 = vpack.c.b16 %v302, %v301
  %v312 = vpack.c.b16 %v304, %v303
  %vm313 = vcmask 31744
  %v315 = vsel %vm313, %v305, 0
  %v318 = vsel %vm313, %v306, 0
  %v321 = vsel %vm313, %v307, 0
  %v324 = vsel %vm313, %v308, 0
  %v327 = vsel %vm313, %v309, 0
  %v330 = vsel %vm313, %v310, 0
  %v333 = vsel %vm313, %v311, 0
  %v336 = vsel %vm313, %v312, 0
  %vm338 = vcmask 1041408
  %v340 = vsel %vm338, %v265, 0
  %342 = vmatprep.subr.bf16.mxu0 0
  %343 = vmatpush1.bf16.msra.mxu0 %v340
  %344 = vmatprep.subr.bf16.mxu0 0
  %345 = vmatpush1.bf16.msra.mxu0 0
  %346 = vmatprep.subr.bf16.mxu0 0
  %347 = vmatpush1.bf16.msra.mxu0 0
  %348 = vmatprep.subr.bf16.mxu0 0
  %349 = vmatpush1.bf16.msra.mxu0 0
  %350 = vmatprep.subr.bf16.mxu0 0
  %351 = vmatpush1.bf16.msra.mxu0 0
  %352 = vmatprep.subr.bf16.mxu0 0
  %353 = vmatpush1.bf16.msra.mxu0 0
  %354 = vmatprep.subr.bf16.mxu0 0
  %355 = vmatpush1.bf16.msra.mxu0 0
  %356 = vmatprep.subr.bf16.mxu0 0
  %357 = vmatpush1.bf16.msra.mxu0 0
  %358 = vmatprep.subr.bf16.mxu0 0
  %359 = vmatpush1.bf16.msra.mxu0 0
  %360 = vmatprep.subr.bf16.mxu0 0
  %361 = vmatpush1.bf16.msra.mxu0 0
  %362 = vmatprep.subr.bf16.mxu0 0
  %363 = vmatpush1.bf16.msra.mxu0 0
  %364 = vmatprep.subr.bf16.mxu0 0
  %365 = vmatpush1.bf16.msra.mxu0 0
  %366 = vmatprep.subr.bf16.mxu0 0
  %367 = vmatpush1.bf16.msra.mxu0 0
  %368 = vmatprep.subr.bf16.mxu0 0
  %369 = vmatpush1.bf16.msra.mxu0 0
  %370 = vmatprep.subr.bf16.mxu0 0
  %371 = vmatpush1.bf16.msra.mxu0 0
  %372 = vmatprep.subr.bf16.mxu0 0
  %373 = vmatpush1.bf16.msra.mxu0 0
  %374 = vmatprep.mubr.bf16.mxu0 0
  %375 = vmatmul.mubr.bf16.gmra.mrb[0].mxu0 %v315
  %v376 = vpop.f32.mrb[0].mxu0
  %v377 = vadd.f32 %v271, %v376
  %v378 = vpop.f32.mrb[0].mxu0
  %v379 = vpop.f32.mrb[0].mxu0
  %v380 = vadd.f32 %v271, %v379
  %v381 = vpop.f32.mrb[0].mxu0
  %382 = vmatprep.mubr.bf16.mxu0 0
  %383 = vmatmul.mubr.bf16.gmra.mrb[0].mxu0 %v318
  %v384 = vpop.f32.mrb[0].mxu0
  %v385 = vadd.f32 %v271, %v384
  %v386 = vpop.f32.mrb[0].mxu0
  %v387 = vpop.f32.mrb[0].mxu0
  %v388 = vadd.f32 %v271, %v387
  %v389 = vpop.f32.mrb[0].mxu0
  %390 = vmatprep.mubr.bf16.mxu0 0
  %391 = vmatmul.mubr.bf16.gmra.mrb[0].mxu0 %v321
  %v392 = vpop.f32.mrb[0].mxu0
  %v393 = vadd.f32 %v271, %v392
  %v394 = vpop.f32.mrb[0].mxu0
  %v395 = vpop.f32.mrb[0].mxu0
  %v396 = vadd.f32 %v271, %v395
  %v397 = vpop.f32.mrb[0].mxu0
  %398 = vmatprep.mubr.bf16.mxu0 0
  %399 = vmatmul.mubr.bf16.gmra.mrb[0].mxu0 %v324
  %v400 = vpop.f32.mrb[0].mxu0
  %v401 = vadd.f32 %v271, %v400
  %v402 = vpop.f32.mrb[0].mxu0
  %v403 = vpop.f32.mrb[0].mxu0
  %v404 = vadd.f32 %v271, %v403
  %v405 = vpop.f32.mrb[0].mxu0
  %406 = vmatprep.mubr.bf16.mxu0 0
  %407 = vmatmul.mubr.bf16.gmra.mrb[0].mxu0 %v327
  %v408 = vpop.f32.mrb[0].mxu0
  %v409 = vadd.f32 %v271, %v408
  %v410 = vpop.f32.mrb[0].mxu0
  %v411 = vpop.f32.mrb[0].mxu0
  %v412 = vadd.f32 %v271, %v411
  %v413 = vpop.f32.mrb[0].mxu0
  %414 = vmatprep.mubr.bf16.mxu0 0
  %415 = vmatmul.mubr.bf16.gmra.mrb[0].mxu0 %v330
  %v416 = vpop.f32.mrb[0].mxu0
  %v417 = vadd.f32 %v271, %v416
  %v418 = vpop.f32.mrb[0].mxu0
  %v419 = vpop.f32.mrb[0].mxu0
  %v420 = vadd.f32 %v271, %v419
  %v421 = vpop.f32.mrb[0].mxu0
  %422 = vmatprep.mubr.bf16.mxu0 0
  %423 = vmatmul.mubr.bf16.gmra.mrb[0].mxu0 %v333
  %v424 = vpop.f32.mrb[0].mxu0
  %v425 = vadd.f32 %v271, %v424
  %v426 = vpop.f32.mrb[0].mxu0
  %v427 = vpop.f32.mrb[0].mxu0
  %v428 = vadd.f32 %v271, %v427
  %v429 = vpop.f32.mrb[0].mxu0
  %430 = vmatprep.mubr.bf16.mxu0 0
  %431 = vmatmul.mubr.bf16.gmra.mrb[0].mxu0 %v336
  %v432 = vpop.f32.mrb[0].mxu0
  %v433 = vadd.f32 %v271, %v432
  %v434 = vpop.f32.mrb[0].mxu0
  %v435 = vpop.f32.mrb[0].mxu0
  %v436 = vadd.f32 %v271, %v435
  %v437 = vpop.f32.mrb[0].mxu0
  %438 = vdwg.mxu0
  %v439 = vadd.f32 %v187, %v377
  %v440 = vadd.f32 %v190, %v380
  %v441 = vadd.f32 %v195, %v385
  %v442 = vadd.f32 %v198, %v388
  %v443 = vadd.f32 %v203, %v393
  %v444 = vadd.f32 %v206, %v396
  %v445 = vadd.f32 %v211, %v401
  %v446 = vadd.f32 %v214, %v404
  %v447 = vadd.f32 %v219, %v409
  %v448 = vadd.f32 %v222, %v412
  %v449 = vadd.f32 %v227, %v417
  %v450 = vadd.f32 %v230, %v420
  %v451 = vadd.f32 %v235, %v425
  %v452 = vadd.f32 %v238, %v428
  %v453 = vadd.f32 %v243, %v433
  %v454 = vadd.f32 %v246, %v436
  %v455 = vmax.f32 %v439, 0.0
  %v456 = vmax.f32 %v440, 0.0
  %v457 = vmax.f32 %v441, 0.0
  %v458 = vmax.f32 %v442, 0.0
  %v459 = vmax.f32 %v443, 0.0
  %v460 = vmax.f32 %v444, 0.0
  %v461 = vmax.f32 %v445, 0.0
  %v462 = vmax.f32 %v446, 0.0
  %v463 = vmax.f32 %v447, 0.0
  %v464 = vmax.f32 %v448, 0.0
  %v465 = vmax.f32 %v449, 0.0
  %v466 = vmax.f32 %v450, 0.0
  %v467 = vmax.f32 %v451, 0.0
  %v468 = vmax.f32 %v452, 0.0
  %v469 = vmax.f32 %v453, 0.0
  %v470 = vmax.f32 %v454, 0.0
  %471 = vst [vmem:[%s6] sm:$0xff] %v455
  %472 = vst [vmem:[%s6 + $0x8] sm:$0xff] %v456
  %473 = vst [vmem:[%s6 + $0x10] sm:$0xff] %v457
  %474 = vst [vmem:[%s6 + $0x18] sm:$0xff] %v458
  %475 = vst [vmem:[%s6 + $0x20] sm:$0xff] %v459
  %476 = vst [vmem:[%s6 + $0x28] sm:$0xff] %v460
  %477 = vst [vmem:[%s6 + $0x30] sm:$0xff] %v461
  %478 = vst [vmem:[%s6 + $0x38] sm:$0xff] %v462
  %479 = vst [vmem:[%s6 + $0x40] sm:$0xff] %v463
  %480 = vst [vmem:[%s6 + $0x48] sm:$0xff] %v464
  %481 = vst [vmem:[%s6 + $0x50] sm:$0xff] %v465
  %482 = vst [vmem:[%s6 + $0x58] sm:$0xff] %v466
  %483 = vst [vmem:[%s6 + $0x60] sm:$0xff] %v467
  %484 = vst [vmem:[%s6 + $0x68] sm:$0xff] %v468
  %485 = vst [vmem:[%s6 + $0x70] sm:$0xff] %v469
  %486 = vst [vmem:[%s6 + $0x78] sm:$0xff] %v470
  // Predicated region
  $region26: #{basic_block_forward.3} parent=0 // pred_check
    _
  $region27: #{basic_block_forward.3} parent=0 // pred_check_branch
    %488 = sbr.rel (0) target = $region29
  $region28: #{basic_block_forward.3} parent=0 // pred_region
    _
  $region29: #{basic_block_forward.3} parent=0 // pred_fallthru
    _
  // Predicated region
  $region30: #{basic_block_forward.3} parent=0 // pred_check
    _
  $region31: #{basic_block_forward.3} parent=0 // pred_check_branch
    %490 = sbr.rel (0) target = $region33
  $region32: #{basic_block_forward.3} parent=0 // pred_region
    _
  $region33: #{basic_block_forward.3} parent=0 // pred_fallthru
    _

</llo_original>
